<compile_context>
chip_gen: v6e
topology: v6e:2x2x1
jax: 0.10.0
libtpu: 0.0.40
codegen_flags: <defaults>
</compile_context>

<pallas_src>
import functools

import jax
import jax.numpy as jnp
from jax import lax
from jax.experimental import pallas as pl
from jax.experimental.pallas import tpu as pltpu

_BN_EPS = 1e-5


# ------------------------------ fused kernel ------------------------------- #

def _fused_mlp_kernel(*refs, n_hidden, last_act):
    """One batch tile through the whole MLP.

    refs = (x_ref,
            [w_ref, packed_ref] * n_hidden,   # packed = [bias'; a; b; c]  (4, N)
            w_out_ref, b_out_ref,
            o_ref)
    """
    x_ref = refs[0]
    o_ref = refs[-1]

    y = x_ref[...]                                            # (tb, in)
    r = 1
    for _ in range(n_hidden):
        w_ref, p_ref = refs[r], refs[r + 1]
        r += 2
        # Linear with BatchNorm already folded into w / bias (MXU, f32 acc).
        z = jnp.dot(y, w_ref[...], preferred_element_type=jnp.float32)
        z = z + p_ref[0:1, :]                                 # bias' (1, N)
        # Poly_2: a*z^2 + b*z + c  (per-neuron coefficients, VPU)
        a = p_ref[1:2, :]
        b = p_ref[2:3, :]
        c = p_ref[3:4, :]
        y = a * (z * z) + b * z + c
        # Dropout: identity in eval mode.

    w_ref, b_ref = refs[r], refs[r + 1]
    z = jnp.dot(y, w_ref[...], preferred_element_type=jnp.float32)
    z = z + b_ref[...]
    if last_act == "sigmoid":
        z = jax.nn.sigmoid(z)
    elif last_act == "softmax":
        z = jax.nn.softmax(z, axis=-1)                        # full out_dim in-block
    o_ref[...] = z.astype(o_ref.dtype)


# ------------------------------ tiling plan -------------------------------- #

def _plan_tiling(batch, n_in, n_out, resident_bytes, dtype_bytes=4):
    """Pick a batch tile, padded batch and explicit VMEM limit."""
    def lanes(n):
        return -(-max(n, 1) // 128) * 128

    # Streamed f32 bytes per batch row (x tile in + out tile back), lane-padded.
    row_bytes = (lanes(n_in) + lanes(n_out)) * dtype_bytes

    try:
        vmem = pltpu.get_tpu_info().vmem_capacity_bytes
    except Exception:  # pragma: no cover - interpret mode / older jax
        vmem = 64 << 20

    # Generation-dependent per-step streaming budget (x2 for double buffering):
    # 128 MiB parts (v5e/v6e) stream ~16 MiB/step, 64 MiB v7x ~6 MiB/step.
    stream_budget = (16 << 20) if vmem >= (96 << 20) else (6 << 20)
    # Leave room for the resident (double-buffered) weights / params.
    stream_budget = min(stream_budget,
                        max(1 << 20, vmem // 2 - 2 * resident_bytes))

    tile = stream_budget // (2 * row_bytes)
    tile = max(8, min(tile, 2048, batch))
    if batch >= 16:
        tile = min(tile, batch // 2)        # >= 2 grid steps -> v7x dual-TC use
    tile = max(8, (tile // 8) * 8)

    if tile >= batch:
        tile, batch_padded = batch, batch   # full-array block (no (8,·) issue)
    else:
        batch_padded = -(-batch // tile) * tile

    needed = 2 * resident_bytes + 2 * tile * row_bytes + (2 << 20)
    vmem_limit = int(min(max(needed, 32 << 20), int(vmem * 0.9)))
    return tile, batch_padded, vmem_limit


# -------------------------------- wrapper ----------------------------------- #

def my_mlp_forward(x, hidden_layers, final_layer, last_act="sigmoid"):
    """Forward pass of My_MLP (inference).

    hidden_layers: list of (w, bias, gamma, beta, running_mean, running_var, a, b, c)
                   with w of shape (in, out) and the rest (1, out).
    final_layer:   (w, bias) with w (in, out), bias (1, out).
    """
    # --- Fold eval-mode BatchNorm into the Linear; pack per-feature params. ---
    fused = []
    for (w, bias, gamma, beta, mean, var, pa, pb, pc) in hidden_layers:
        scale = gamma.astype(jnp.float32) * lax.rsqrt(var.astype(jnp.float32) + _BN_EPS)
        w_eff = (w.astype(jnp.float32) * scale)                       # (in, N)
        b_eff = bias.astype(jnp.float32) * scale + (
            beta.astype(jnp.float32) - mean.astype(jnp.float32) * scale)
        packed = jnp.concatenate(
            [b_eff, pa.astype(jnp.float32), pb.astype(jnp.float32),
             pc.astype(jnp.float32)], axis=0)                          # (4, N)
        fused.append((w_eff, packed))
    w_out, b_out = final_layer
    w_out = w_out.astype(jnp.float32)
    b_out = b_out.astype(jnp.float32)

    batch, n_in = x.shape
    out_dim = w_out.shape[1]

    # Resident (VMEM, constant-index) parameter bytes, (8,128)-tile padded.
    def _pad2(r, c):
        return (-(-max(r, 1) // 8) * 8) * (-(-max(c, 1) // 128) * 128)

    resident = 0
    for w_eff, packed in fused:
        resident += (_pad2(*w_eff.shape) + _pad2(*packed.shape)) * 4
    resident += (_pad2(*w_out.shape) + _pad2(*b_out.shape)) * 4

    tile, batch_padded, vmem_limit = _plan_tiling(batch, n_in, out_dim, resident)

    if batch_padded != batch:
        x = jnp.pad(x, ((0, batch_padded - batch), (0, 0)))

    flat_params = []
    in_specs = [pl.BlockSpec((tile, n_in), lambda i: (i, 0))]
    for w_eff, packed in fused:
        flat_params += [w_eff, packed]
        in_specs += [pl.BlockSpec(w_eff.shape, lambda i: (0, 0)),
                     pl.BlockSpec(packed.shape, lambda i: (0, 0))]
    flat_params += [w_out, b_out]
    in_specs += [pl.BlockSpec(w_out.shape, lambda i: (0, 0)),
                 pl.BlockSpec(b_out.shape, lambda i: (0, 0))]

    kernel = functools.partial(
        _fused_mlp_kernel, n_hidden=len(fused), last_act=last_act)

    out = pl.pallas_call(
        kernel,
        out_shape=jax.ShapeDtypeStruct((batch_padded, out_dim), x.dtype),
        grid_spec=pltpu.PrefetchScalarGridSpec(
            num_scalar_prefetch=0,
            grid=(batch_padded // tile,),
            in_specs=in_specs,
            out_specs=pl.BlockSpec((tile, out_dim), lambda i: (i, 0)),
        ),
        compiler_params=pltpu.CompilerParams(
            dimension_semantics=("parallel",),
            vmem_limit_bytes=vmem_limit,
        ),
    )(x, *flat_params)

    return out[:batch] if batch_padded != batch else out


# ------------------------------- reference ---------------------------------- #

def _reference(x, hidden_layers, final_layer, last_act):
    y = x.astype(jnp.float32)
    for (w, bias, gamma, beta, mean, var, pa, pb, pc) in hidden_layers:
        y = y @ w + bias
        y = gamma * (y - mean) / jnp.sqrt(var + _BN_EPS) + beta
        y = pa * y * y + pb * y + pc
    w, bias = final_layer
    y = y @ w + bias
    if last_act == "sigmoid":
        y = jax.nn.sigmoid(y)
    elif last_act == "softmax":
        y = jax.nn.softmax(y, axis=-1)
    return y


# --------------------------------- main -------------------------------------- #

def _init_params(key, input_dim, hidden_nbs, out_dim):
    hidden_layers = []
    dim = input_dim
    for nb in hidden_nbs:
        key, kw, kb, kg, kbeta, km, kv, ka, kpb, kc = jax.random.split(key, 10)
        w = jax.random.normal(kw, (dim, nb), jnp.float32) / jnp.sqrt(dim)
        bias = 0.1 * jax.random.normal(kb, (1, nb), jnp.float32)
        gamma = 1.0 + 0.1 * jax.random.normal(kg, (1, nb), jnp.float32)
        beta = 0.1 * jax.random.normal(kbeta, (1, nb), jnp.float32)
        running_mean = 0.1 * jax.random.normal(km, (1, nb), jnp.float32)
        running_var = 1.0 + 0.1 * jnp.abs(jax.random.normal(kv, (1, nb), jnp.float32))
        a = jax.random.normal(ka, (1, nb), jnp.float32)
        b = jax.random.normal(kpb, (1, nb), jnp.float32)
        c = jax.random.normal(kc, (1, nb), jnp.float32)
        hidden_layers.append((w, bias, gamma, beta, running_mean, running_var, a, b, c))
        dim = nb
    key, kw, kb = jax.random.split(key, 3)
    w_out = jax.random.normal(kw, (dim, out_dim), jnp.float32) / jnp.sqrt(dim)
    b_out = 0.1 * jax.random.normal(kb, (1, out_dim), jnp.float32)
    return hidden_layers, (w_out, b_out)


if __name__ == "__main__":
    key = jax.random.PRNGKey(0)
    batch, input_dim, hidden_nbs, out_dim = 64, 32, [64, 32], 8

    key, kx, kp = jax.random.split(key, 3)
    x = jax.random.normal(kx, (batch, input_dim), dtype=jnp.float32)
    hidden_layers, final_layer = _init_params(kp, input_dim, hidden_nbs, out_dim)

    # sigmoid head
    out = my_mlp_forward(x, hidden_layers, final_layer, last_act="sigmoid")
    out = jax.block_until_ready(out)
    ref = _reference(x, hidden_layers, final_layer, "sigmoid")
    assert out.shape == (batch, out_dim), out.shape
    assert jnp.allclose(out, ref, atol=1e-4, rtol=1e-4)

    # softmax head (full out_dim sits in one block -> softmax is exact)
    out_sm = my_mlp_forward(x, hidden_layers, final_layer, last_act="softmax")
    out_sm = jax.block_until_ready(out_sm)
    ref_sm = _reference(x, hidden_layers, final_layer, "softmax")
    assert jnp.allclose(out_sm, ref_sm, atol=1e-4, rtol=1e-4)

    # non-multiple-of-8 batch exercises the pad-to-tile path
    x_odd = x[:50]
    out_odd = jax.block_until_ready(
        my_mlp_forward(x_odd, hidden_layers, final_layer, last_act="sigmoid"))
    ref_odd = _reference(x_odd, hidden_layers, final_layer, "sigmoid")
    assert out_odd.shape == (50, out_dim)
    assert jnp.allclose(out_odd, ref_odd, atol=1e-4, rtol=1e-4)

    print("KERNEL_OK")
</pallas_src>

<mosaic_0001>
module attributes {stable_mosaic.version = 11 : i64} {
  func.func @_fused_mlp_kernel(%arg0: i32, %arg1: memref<32x32xf32, #tpu.memory_space<vmem>>, %arg2: memref<32x64xf32, #tpu.memory_space<vmem>>, %arg3: memref<4x64xf32, #tpu.memory_space<vmem>>, %arg4: memref<64x32xf32, #tpu.memory_space<vmem>>, %arg5: memref<4x32xf32, #tpu.memory_space<vmem>>, %arg6: memref<32x8xf32, #tpu.memory_space<vmem>>, %arg7: memref<1x8xf32, #tpu.memory_space<vmem>>, %arg8: memref<32x8xf32, #tpu.memory_space<vmem>>) attributes {dimension_semantics = [#tpu.dimension_semantics<parallel>], iteration_bounds = array<i64: 2>, scalar_prefetch = 0 : i64, scratch_operands = 0 : i64, tpu.core_type = #tpu.core_type<tc>, window_params = [{transform_indices = @transform_0, window_bounds = array<i64: 32, 32>}, {pipeline_mode = #tpu.pipeline_mode<synchronous>, transform_indices = @transform_1, window_bounds = array<i64: 32, 64>}, {pipeline_mode = #tpu.pipeline_mode<synchronous>, transform_indices = @transform_2, window_bounds = array<i64: 4, 64>}, {pipeline_mode = #tpu.pipeline_mode<synchronous>, transform_indices = @transform_3, window_bounds = array<i64: 64, 32>}, {pipeline_mode = #tpu.pipeline_mode<synchronous>, transform_indices = @transform_4, window_bounds = array<i64: 4, 32>}, {pipeline_mode = #tpu.pipeline_mode<synchronous>, transform_indices = @transform_5, window_bounds = array<i64: 32, 8>}, {pipeline_mode = #tpu.pipeline_mode<synchronous>, transform_indices = @transform_6, window_bounds = array<i64: 1, 8>}, {transform_indices = @transform_7, window_bounds = array<i64: 32, 8>}]} {
    %c0 = arith.constant 0 : index
    %c0_0 = arith.constant 0 : index
    %0 = vector.load %arg1[%c0, %c0_0] : memref<32x32xf32, #tpu.memory_space<vmem>>, vector<32x32xf32>
    %c0_1 = arith.constant 0 : index
    %c0_2 = arith.constant 0 : index
    %1 = vector.load %arg2[%c0_1, %c0_2] : memref<32x64xf32, #tpu.memory_space<vmem>>, vector<32x64xf32>
    %cst = arith.constant dense<0.000000e+00> : vector<32x64xf32>
    %2 = tpu.matmul %0, %1, %cst {dimension_numbers = #tpu.dot_dimension_numbers<[1], [0], [0], [1], [0, 0, 1, 1], [], []>} : vector<32x32xf32>, vector<32x64xf32>, vector<32x64xf32> -> vector<32x64xf32>
    %c0_3 = arith.constant 0 : index
    %c0_4 = arith.constant 0 : index
    %3 = vector.load %arg3[%c0_3, %c0_4] : memref<4x64xf32, #tpu.memory_space<vmem>>, vector<1x64xf32>
    %4 = vector.broadcast %3 : vector<1x64xf32> to vector<32x64xf32>
    %5 = arith.addf %2, %4 : vector<32x64xf32>
    %c1 = arith.constant 1 : index
    %c0_5 = arith.constant 0 : index
    %6 = vector.load %arg3[%c1, %c0_5] : memref<4x64xf32, #tpu.memory_space<vmem>>, vector<1x64xf32>
    %c2 = arith.constant 2 : index
    %c0_6 = arith.constant 0 : index
    %7 = vector.load %arg3[%c2, %c0_6] : memref<4x64xf32, #tpu.memory_space<vmem>>, vector<1x64xf32>
    %c3 = arith.constant 3 : index
    %c0_7 = arith.constant 0 : index
    %8 = vector.load %arg3[%c3, %c0_7] : memref<4x64xf32, #tpu.memory_space<vmem>>, vector<1x64xf32>
    %9 = arith.mulf %5, %5 : vector<32x64xf32>
    %10 = vector.broadcast %6 : vector<1x64xf32> to vector<32x64xf32>
    %11 = arith.mulf %10, %9 : vector<32x64xf32>
    %12 = vector.broadcast %7 : vector<1x64xf32> to vector<32x64xf32>
    %13 = arith.mulf %12, %5 : vector<32x64xf32>
    %14 = arith.addf %11, %13 : vector<32x64xf32>
    %15 = vector.broadcast %8 : vector<1x64xf32> to vector<32x64xf32>
    %16 = arith.addf %14, %15 : vector<32x64xf32>
    %c0_8 = arith.constant 0 : index
    %c0_9 = arith.constant 0 : index
    %17 = vector.load %arg4[%c0_8, %c0_9] : memref<64x32xf32, #tpu.memory_space<vmem>>, vector<64x32xf32>
    %cst_10 = arith.constant dense<0.000000e+00> : vector<32x32xf32>
    %18 = tpu.matmul %16, %17, %cst_10 {dimension_numbers = #tpu.dot_dimension_numbers<[1], [0], [0], [1], [0, 0, 1, 1], [], []>} : vector<32x64xf32>, vector<64x32xf32>, vector<32x32xf32> -> vector<32x32xf32>
    %c0_11 = arith.constant 0 : index
    %c0_12 = arith.constant 0 : index
    %19 = vector.load %arg5[%c0_11, %c0_12] : memref<4x32xf32, #tpu.memory_space<vmem>>, vector<1x32xf32>
    %20 = vector.broadcast %19 : vector<1x32xf32> to vector<32x32xf32>
    %21 = arith.addf %18, %20 : vector<32x32xf32>
    %c1_13 = arith.constant 1 : index
    %c0_14 = arith.constant 0 : index
    %22 = vector.load %arg5[%c1_13, %c0_14] : memref<4x32xf32, #tpu.memory_space<vmem>>, vector<1x32xf32>
    %c2_15 = arith.constant 2 : index
    %c0_16 = arith.constant 0 : index
    %23 = vector.load %arg5[%c2_15, %c0_16] : memref<4x32xf32, #tpu.memory_space<vmem>>, vector<1x32xf32>
    %c3_17 = arith.constant 3 : index
    %c0_18 = arith.constant 0 : index
    %24 = vector.load %arg5[%c3_17, %c0_18] : memref<4x32xf32, #tpu.memory_space<vmem>>, vector<1x32xf32>
    %25 = arith.mulf %21, %21 : vector<32x32xf32>
    %26 = vector.broadcast %22 : vector<1x32xf32> to vector<32x32xf32>
    %27 = arith.mulf %26, %25 : vector<32x32xf32>
    %28 = vector.broadcast %23 : vector<1x32xf32> to vector<32x32xf32>
    %29 = arith.mulf %28, %21 : vector<32x32xf32>
    %30 = arith.addf %27, %29 : vector<32x32xf32>
    %31 = vector.broadcast %24 : vector<1x32xf32> to vector<32x32xf32>
    %32 = arith.addf %30, %31 : vector<32x32xf32>
    %c0_19 = arith.constant 0 : index
    %c0_20 = arith.constant 0 : index
    %33 = vector.load %arg6[%c0_19, %c0_20] : memref<32x8xf32, #tpu.memory_space<vmem>>, vector<32x8xf32>
    %cst_21 = arith.constant dense<0.000000e+00> : vector<32x8xf32>
    %34 = tpu.matmul %32, %33, %cst_21 {dimension_numbers = #tpu.dot_dimension_numbers<[1], [0], [0], [1], [0, 0, 1, 1], [], []>} : vector<32x32xf32>, vector<32x8xf32>, vector<32x8xf32> -> vector<32x8xf32>
    %c0_22 = arith.constant 0 : index
    %c0_23 = arith.constant 0 : index
    %35 = vector.load %arg7[%c0_22, %c0_23] : memref<1x8xf32, #tpu.memory_space<vmem>>, vector<1x8xf32>
    %36 = vector.broadcast %35 : vector<1x8xf32> to vector<32x8xf32>
    %37 = arith.addf %34, %36 : vector<32x8xf32>
    %38 = arith.negf %37 : vector<32x8xf32>
    %39 = math.exp %38 : vector<32x8xf32>
    %cst_24 = arith.constant 1.000000e+00 : f32
    %40 = vector.broadcast %cst_24 : f32 to vector<32x8xf32>
    %41 = arith.addf %40, %39 : vector<32x8xf32>
    %42 = arith.divf %40, %41 : vector<32x8xf32>
    %c0_25 = arith.constant 0 : index
    %c0_26 = arith.constant 0 : index
    %43 = vector.load %arg8[%c0_25, %c0_26] : memref<32x8xf32, #tpu.memory_space<vmem>>, vector<32x8xf32>
    tpu.vector_store %arg8[%c0_25, %c0_26], %42 {strides = array<i32>} : memref<32x8xf32, #tpu.memory_space<vmem>>, vector<32x8xf32>,
    return
  }
  func.func @transform_0(%arg0: i32) -> (i32, i32) {
    %c0_i32 = arith.constant 0 : i32
    %c0_i32_0 = arith.constant 0 : i32
    return %arg0, %c0_i32 : i32, i32
  }
  func.func @transform_1(%arg0: i32) -> (i32, i32) {
    %c0_i32 = arith.constant 0 : i32
    %c0_i32_0 = arith.constant 0 : i32
    %c0_i32_1 = arith.constant 0 : i32
    return %c0_i32, %c0_i32_0 : i32, i32
  }
  func.func @transform_2(%arg0: i32) -> (i32, i32) {
    %c0_i32 = arith.constant 0 : i32
    %c0_i32_0 = arith.constant 0 : i32
    %c0_i32_1 = arith.constant 0 : i32
    return %c0_i32, %c0_i32_0 : i32, i32
  }
  func.func @transform_3(%arg0: i32) -> (i32, i32) {
    %c0_i32 = arith.constant 0 : i32
    %c0_i32_0 = arith.constant 0 : i32
    %c0_i32_1 = arith.constant 0 : i32
    return %c0_i32, %c0_i32_0 : i32, i32
  }
  func.func @transform_4(%arg0: i32) -> (i32, i32) {
    %c0_i32 = arith.constant 0 : i32
    %c0_i32_0 = arith.constant 0 : i32
    %c0_i32_1 = arith.constant 0 : i32
    return %c0_i32, %c0_i32_0 : i32, i32
  }
  func.func @transform_5(%arg0: i32) -> (i32, i32) {
    %c0_i32 = arith.constant 0 : i32
    %c0_i32_0 = arith.constant 0 : i32
    %c0_i32_1 = arith.constant 0 : i32
    return %c0_i32, %c0_i32_0 : i32, i32
  }
  func.func @transform_6(%arg0: i32) -> (i32, i32) {
    %c0_i32 = arith.constant 0 : i32
    %c0_i32_0 = arith.constant 0 : i32
    %c0_i32_1 = arith.constant 0 : i32
    return %c0_i32, %c0_i32_0 : i32, i32
  }
  func.func @transform_7(%arg0: i32) -> (i32, i32) {
    %c0_i32 = arith.constant 0 : i32
    %c0_i32_0 = arith.constant 0 : i32
    return %arg0, %c0_i32 : i32, i32
  }
}

</mosaic_0001>

<llo_original>
// kernel: tpu_custom_call.1
$region0: #{tpu_custom_call.1}
  #allocation0 [shape = 'u32[]', space=smem, size = 0x4, offset = 0x4, fixed_abs, tag = 'smem constant byte address 0x4 - core index']
  #allocation1 [shape = 'u32[144,128]{1,0:T(1,128)}', space=vmem, size = 0x12000, scoped, tag = 'internal scratch']
  %s0 = inlined_call_operand.vmem [shape: f32[64,32], index: 0, kind: input, shape index: {}]
  %s1 = inlined_call_operand.vmem [shape: f32[32,64], index: 1, kind: input, shape index: {}]
  %s2 = inlined_call_operand.vmem [shape: f32[4,64], index: 2, kind: input, shape index: {}]
  %s3 = inlined_call_operand.vmem [shape: f32[64,32], index: 3, kind: input, shape index: {}]
  %s4 = inlined_call_operand.vmem [shape: f32[4,32], index: 4, kind: input, shape index: {}]
  %s5 = inlined_call_operand.vmem [shape: f32[32,8], index: 5, kind: input, shape index: {}]
  %s6 = inlined_call_operand.vmem [shape: f32[1,8], index: 6, kind: input, shape index: {}]
  %s7 = inlined_call_operand.vmem [shape: f32[64,8], index: 7, kind: output, shape index: {}]
  %s8 = sld [smem:[#allocation0]]
  $region61: #{tpu_custom_call.1} parent=0
    _
  %s10 = ssub.s32 1, %s8
  %s11 = scalar_select 0, %s10, %s8
  loop: start=0, step=1, limit=4
  $region2: #{tpu_custom_call.1} parent=0 // loop_pre_header
    _
  $region3: #{tpu_custom_call.1} parent=0 // loop_header
    %s13 = sphi 0, %s17
    %p14 = scmp.ge.s32.totalorder %s13, 4
    %s23 = sphi 0, %s25
    %s26 = sphi 0, %s23
    %s27 = sphi 0, %s26
    %s43 = sphi 0, %s27
    %s47 = sphi 0, %s47
    %s49 = sphi 0, %s47
    %s50 = sphi 0, %s49
    %s64 = sphi 0, %s50
    %s68 = sphi 0, %s68
    %s70 = sphi 0, %s68
    %s71 = sphi 0, %s70
    %s85 = sphi 0, %s71
    %s89 = sphi 0, %s89
    %s91 = sphi 0, %s89
    %s92 = sphi 0, %s91
    %s106 = sphi 0, %s92
    %s110 = sphi 0, %s110
    %s112 = sphi 0, %s110
    %s113 = sphi 0, %s112
    %s127 = sphi 0, %s113
    %s131 = sphi 0, %s131
    %s133 = sphi 0, %s131
    %s134 = sphi 0, %s133
    %s148 = sphi 0, %s134
    %s152 = sphi 0, %s152
    %s154 = sphi 0, %s152
    %s155 = sphi 0, %s154
    %s169 = sphi 0, %s155
    %s175 = sphi 0, %s177
    %s178 = sphi 0, %s175
    %s179 = sphi 0, %s178
    %s195 = sphi 0, %s179
  $region4: #{tpu_custom_call.1} parent=0 // loop_header_branch
    %16 = sbr.rel (%p14) target = $region8
  $region5: #{tpu_custom_call.1} parent=0 // loop_body
    %s18 = ssub.s32 %s13, 1
    %s19 = ssub.s32 %s13, 2
    %s20 = sadd.s32 %s13, 1
    %s21 = ssub.s32 %s13, %s20
    %p22 = scmp.eq.s32.totalorder %s21, 0
    %s24 = sadd.s32 %s23, 1
    %s25 = scalar_select %p22, %s23, %s24
    %p28 = pneg %p22
    %p29 = scmp.eq.s32.totalorder %s13, 1
    %p30 = por %p28, %p29
    %p31 = scmp.ne.s32.totalorder %s23, %s26
    %p32 = scmp.eq.s32.totalorder %s13, 0
    %p33 = por %p31, %p32
    %p34 = scmp.ne.s32.totalorder %s23, %s26
    %p35 = scmp.eq.s32.totalorder %s18, 1
    %p36 = por %p34, %p35
    %p37 = scmp.ne.s32.totalorder %s26, %s27
    %p38 = scmp.eq.s32.totalorder %s18, 0
    %p39 = por %p37, %p38
    %p40 = scmp.ne.s32.totalorder %s26, %s27
    %p41 = scmp.eq.s32.totalorder %s19, 1
    %p42 = por %p40, %p41
    %p44 = scmp.ne.s32.totalorder %s27, %s43
    %p45 = scmp.eq.s32.totalorder %s19, 0
    %p46 = por %p44, %p45
    %s48 = sadd.s32 %s47, 1
    %p51 = scmp.eq.s32.totalorder %s13, 1
    %p52 = scmp.ne.s32.totalorder %s47, %s49
    %p53 = scmp.eq.s32.totalorder %s13, 0
    %p54 = por %p52, %p53
    %p55 = scmp.ne.s32.totalorder %s47, %s49
    %p56 = scmp.eq.s32.totalorder %s18, 1
    %p57 = por %p55, %p56
    %p58 = scmp.ne.s32.totalorder %s49, %s50
    %p59 = scmp.eq.s32.totalorder %s18, 0
    %p60 = por %p58, %p59
    %p61 = scmp.ne.s32.totalorder %s49, %s50
    %p62 = scmp.eq.s32.totalorder %s19, 1
    %p63 = por %p61, %p62
    %p65 = scmp.ne.s32.totalorder %s50, %s64
    %p66 = scmp.eq.s32.totalorder %s19, 0
    %p67 = por %p65, %p66
    %s69 = sadd.s32 %s68, 1
    %p72 = scmp.eq.s32.totalorder %s13, 1
    %p73 = scmp.ne.s32.totalorder %s68, %s70
    %p74 = scmp.eq.s32.totalorder %s13, 0
    %p75 = por %p73, %p74
    %p76 = scmp.ne.s32.totalorder %s68, %s70
    %p77 = scmp.eq.s32.totalorder %s18, 1
    %p78 = por %p76, %p77
    %p79 = scmp.ne.s32.totalorder %s70, %s71
    %p80 = scmp.eq.s32.totalorder %s18, 0
    %p81 = por %p79, %p80
    %p82 = scmp.ne.s32.totalorder %s70, %s71
    %p83 = scmp.eq.s32.totalorder %s19, 1
    %p84 = por %p82, %p83
    %p86 = scmp.ne.s32.totalorder %s71, %s85
    %p87 = scmp.eq.s32.totalorder %s19, 0
    %p88 = por %p86, %p87
    %s90 = sadd.s32 %s89, 1
    %p93 = scmp.eq.s32.totalorder %s13, 1
    %p94 = scmp.ne.s32.totalorder %s89, %s91
    %p95 = scmp.eq.s32.totalorder %s13, 0
    %p96 = por %p94, %p95
    %p97 = scmp.ne.s32.totalorder %s89, %s91
    %p98 = scmp.eq.s32.totalorder %s18, 1
    %p99 = por %p97, %p98
    %p100 = scmp.ne.s32.totalorder %s91, %s92
    %p101 = scmp.eq.s32.totalorder %s18, 0
    %p102 = por %p100, %p101
    %p103 = scmp.ne.s32.totalorder %s91, %s92
    %p104 = scmp.eq.s32.totalorder %s19, 1
    %p105 = por %p103, %p104
    %p107 = scmp.ne.s32.totalorder %s92, %s106
    %p108 = scmp.eq.s32.totalorder %s19, 0
    %p109 = por %p107, %p108
    %s111 = sadd.s32 %s110, 1
    %p114 = scmp.eq.s32.totalorder %s13, 1
    %p115 = scmp.ne.s32.totalorder %s110, %s112
    %p116 = scmp.eq.s32.totalorder %s13, 0
    %p117 = por %p115, %p116
    %p118 = scmp.ne.s32.totalorder %s110, %s112
    %p119 = scmp.eq.s32.totalorder %s18, 1
    %p120 = por %p118, %p119
    %p121 = scmp.ne.s32.totalorder %s112, %s113
    %p122 = scmp.eq.s32.totalorder %s18, 0
    %p123 = por %p121, %p122
    %p124 = scmp.ne.s32.totalorder %s112, %s113
    %p125 = scmp.eq.s32.totalorder %s19, 1
    %p126 = por %p124, %p125
    %p128 = scmp.ne.s32.totalorder %s113, %s127
    %p129 = scmp.eq.s32.totalorder %s19, 0
    %p130 = por %p128, %p129
    %s132 = sadd.s32 %s131, 1
    %p135 = scmp.eq.s32.totalorder %s13, 1
    %p136 = scmp.ne.s32.totalorder %s131, %s133
    %p137 = scmp.eq.s32.totalorder %s13, 0
    %p138 = por %p136, %p137
    %p139 = scmp.ne.s32.totalorder %s131, %s133
    %p140 = scmp.eq.s32.totalorder %s18, 1
    %p141 = por %p139, %p140
    %p142 = scmp.ne.s32.totalorder %s133, %s134
    %p143 = scmp.eq.s32.totalorder %s18, 0
    %p144 = por %p142, %p143
    %p145 = scmp.ne.s32.totalorder %s133, %s134
    %p146 = scmp.eq.s32.totalorder %s19, 1
    %p147 = por %p145, %p146
    %p149 = scmp.ne.s32.totalorder %s134, %s148
    %p150 = scmp.eq.s32.totalorder %s19, 0
    %p151 = por %p149, %p150
    %s153 = sadd.s32 %s152, 1
    %p156 = scmp.eq.s32.totalorder %s13, 1
    %p157 = scmp.ne.s32.totalorder %s152, %s154
    %p158 = scmp.eq.s32.totalorder %s13, 0
    %p159 = por %p157, %p158
    %p160 = scmp.ne.s32.totalorder %s152, %s154
    %p161 = scmp.eq.s32.totalorder %s18, 1
    %p162 = por %p160, %p161
    %p163 = scmp.ne.s32.totalorder %s154, %s155
    %p164 = scmp.eq.s32.totalorder %s18, 0
    %p165 = por %p163, %p164
    %p166 = scmp.ne.s32.totalorder %s154, %s155
    %p167 = scmp.eq.s32.totalorder %s19, 1
    %p168 = por %p166, %p167
    %p170 = scmp.ne.s32.totalorder %s155, %s169
    %p171 = scmp.eq.s32.totalorder %s19, 0
    %p172 = por %p170, %p171
    %s173 = ssub.s32 %s13, %s20
    %p174 = scmp.eq.s32.totalorder %s173, 0
    %s176 = sadd.s32 %s175, 1
    %s177 = scalar_select %p174, %s175, %s176
    %p180 = pneg %p174
    %p181 = scmp.eq.s32.totalorder %s13, 1
    %p182 = por %p180, %p181
    %p183 = scmp.ne.s32.totalorder %s175, %s178
    %p184 = scmp.eq.s32.totalorder %s13, 0
    %p185 = por %p183, %p184
    %p186 = scmp.ne.s32.totalorder %s175, %s178
    %p187 = scmp.eq.s32.totalorder %s18, 1
    %p188 = por %p186, %p187
    %p189 = scmp.ne.s32.totalorder %s178, %s179
    %p190 = scmp.eq.s32.totalorder %s18, 0
    %p191 = por %p189, %p190
    %p192 = scmp.ne.s32.totalorder %s178, %s179
    %p193 = scmp.eq.s32.totalorder %s19, 1
    %p194 = por %p192, %p193
    %p196 = scmp.ne.s32.totalorder %s179, %s195
    %p197 = scmp.eq.s32.totalorder %s19, 0
    %p198 = por %p196, %p197
    %p199 = scmp.le.s32.totalorder 1, %s13
    %p200 = scmp.lt.s32.totalorder %s13, 3
    %p201 = pnand %p199, %p200
    %p202 = pneg %p201
    // Predicated region
    $region9: #{tpu_custom_call.1} parent=5 // pred_check
      _
    $region10: #{tpu_custom_call.1} parent=5 // pred_check_branch
      %204 = sbr.rel (%p201) target = $region12
    $region11: #{tpu_custom_call.1} parent=5 // pred_region
      %s205 = ssub.s32 %s13, 1
      // Predicated region
      $region13: #{tpu_custom_call.1} parent=11 // pred_check
        %p206 = pneg %p60
      $region14: #{tpu_custom_call.1} parent=11 // pred_check_branch
        %208 = sbr.rel (%p206) target = $region16
      $region15: #{tpu_custom_call.1} parent=11 // pred_region
        _
      $region16: #{tpu_custom_call.1} parent=11 // pred_fallthru
        _
      // Predicated region
      $region17: #{tpu_custom_call.1} parent=11 // pred_check
        %p209 = pneg %p81
      $region18: #{tpu_custom_call.1} parent=11 // pred_check_branch
        %211 = sbr.rel (%p209) target = $region20
      $region19: #{tpu_custom_call.1} parent=11 // pred_region
        _
      $region20: #{tpu_custom_call.1} parent=11 // pred_fallthru
        _
      // Predicated region
      $region21: #{tpu_custom_call.1} parent=11 // pred_check
        %p212 = pneg %p102
      $region22: #{tpu_custom_call.1} parent=11 // pred_check_branch
        %214 = sbr.rel (%p212) target = $region24
      $region23: #{tpu_custom_call.1} parent=11 // pred_region
        _
      $region24: #{tpu_custom_call.1} parent=11 // pred_fallthru
        _
      // Predicated region
      $region25: #{tpu_custom_call.1} parent=11 // pred_check
        %p215 = pneg %p123
      $region26: #{tpu_custom_call.1} parent=11 // pred_check_branch
        %217 = sbr.rel (%p215) target = $region28
      $region27: #{tpu_custom_call.1} parent=11 // pred_region
        _
      $region28: #{tpu_custom_call.1} parent=11 // pred_fallthru
        _
      // Predicated region
      $region29: #{tpu_custom_call.1} parent=11 // pred_check
        %p218 = pneg %p144
      $region30: #{tpu_custom_call.1} parent=11 // pred_check_branch
        %220 = sbr.rel (%p218) target = $region32
      $region31: #{tpu_custom_call.1} parent=11 // pred_region
        _
      $region32: #{tpu_custom_call.1} parent=11 // pred_fallthru
        _
      // Predicated region
      $region33: #{tpu_custom_call.1} parent=11 // pred_check
        %p221 = pneg %p165
      $region34: #{tpu_custom_call.1} parent=11 // pred_check_branch
        %223 = sbr.rel (%p221) target = $region36
      $region35: #{tpu_custom_call.1} parent=11 // pred_region
        _
      $region36: #{tpu_custom_call.1} parent=11 // pred_fallthru
        _
    $region12: #{tpu_custom_call.1} parent=5 // pred_fallthru
      _
    %p224 = scmp.lt.s32.totalorder %s13, 2
    // Predicated region
    $region37: #{tpu_custom_call.1} parent=5 // pred_check
      %p225 = pneg %p224
    $region38: #{tpu_custom_call.1} parent=5 // pred_check_branch
      %227 = sbr.rel (%p225) target = $region40
    $region39: #{tpu_custom_call.1} parent=5 // pred_region
      // Predicated region
      $region41: #{tpu_custom_call.1} parent=39 // pred_check
        %p228 = pneg %p33
      $region42: #{tpu_custom_call.1} parent=39 // pred_check_branch
        %230 = sbr.rel (%p228) target = $region44
      $region43: #{tpu_custom_call.1} parent=39 // pred_region
        %s231 = smul.u32 4, %s13
        %p232 = scmp.lt.s32.totalorder %s231, 7
        %s233 = scalar_select %p232, %s231, 7
        %s234 = smul.addr %s233, 8
        %s235 = scalar_lea.vmem %s0, %s234
        %s236 = smul.u32 4, %s13
      $region44: #{tpu_custom_call.1} parent=39 // pred_fallthru
        _
    $region40: #{tpu_custom_call.1} parent=5 // pred_fallthru
      _
    %p237 = scmp.le.s32.totalorder 1, %s13
    %p238 = scmp.lt.s32.totalorder %s13, 3
    %p239 = pnand %p237, %p238
    %p240 = pneg %p239
    // Predicated region
    $region45: #{tpu_custom_call.1} parent=5 // pred_check
      _
    $region46: #{tpu_custom_call.1} parent=5 // pred_check_branch
      %242 = sbr.rel (%p239) target = $region48
    $region47: #{tpu_custom_call.1} parent=5 // pred_region
      %s243 = ssub.s32 %s13, 1
      %s244 = smul.u32 4, %s18
      %p245 = scmp.lt.s32.totalorder %s244, 7
      %s246 = scalar_select %p245, %s244, 7
      %s247 = smul.addr %s246, 8
      %s248 = scalar_lea.vmem %s0, %s247
      %p249 = pneg %p39
      %p250 = pneg %p36
      %p251 = pneg %p60
      %p252 = pneg %p57
      %p253 = pneg %p81
      %p254 = pneg %p78
      %p255 = pneg %p102
      %p256 = pneg %p99
      %p257 = pneg %p123
      %p258 = pneg %p120
      %p259 = pneg %p144
      %p260 = pneg %p141
      %p261 = pneg %p165
      %p262 = pneg %p162
      %p263 = pneg %p191
      %p264 = pneg %p188
      %s265 = smul.u32 4, %s18
      %p266 = scmp.lt.s32.totalorder %s265, 7
      %s267 = scalar_select %p266, %s265, 7
      %s268 = smul.addr %s267, 8
      %s269 = scalar_lea.vmem %s7, %s268
      %s270 = smul.u32 4, %s18
      %p271 = scmp.lt.s32.totalorder %s270, 7
      %s272 = scalar_select %p271, %s270, 7
      %s273 = smul.addr %s272, 8
      %s274 = scalar_lea.vmem %s0, %s273
      %s275 = smul.u32 4, %s18
      %s276 = smul.u32 4, %s18
      %p277 = scmp.lt.s32.totalorder %s276, 7
      %s278 = scalar_select %p277, %s276, 7
      %s279 = smul.addr %s278, 8
      %s280 = scalar_lea.vmem %s7, %s279
      %s281 = smul.u32 4, %s18
      %v282 = vld [vmem:[%s274] sm:$0xff]
      %v283 = vld [vmem:[%s274 + $0x8] sm:$0xff]
      %v284 = vld [vmem:[%s274 + $0x10] sm:$0xff]
      %v285 = vld [vmem:[%s274 + $0x18] sm:$0xff]
      %v286 = vld [vmem:[%s1] sm:$0xff]
      %v287 = vld [vmem:[%s1 + $0x8] sm:$0xff]
      %v288 = vld [vmem:[%s1 + $0x10] sm:$0xff]
      %v289 = vld [vmem:[%s1 + $0x18] sm:$0xff]
      %v290 = vld [vmem:[%s2] sm:$0x1]
      %v291 = vlaneseq
      %v292 = vshrl.u32 %v291, 7
      %v293 = vsub.s32 0, %v292
      %v294 = vrot.slane %v290, %v293
      %vm295 = vcmask 261120
      %v297 = vsel %vm295, %v282, 0
      %v300 = vsel %vm295, %v283, 0
      %v303 = vsel %vm295, %v284, 0
      %v306 = vsel %vm295, %v285, 0
      %308 = vmatprep.subr.mxu0 0.0
      %309 = vmatpush1.msra.mxu0 0.0
      %310 = vmatprep.subr.mxu0 0.0
      %311 = vmatpush1.msra.mxu0 0.0
      %312 = vmatprep.subr.mxu0 0.0
      %313 = vmatpush1.msra.mxu0 0.0
      %314 = vmatprep.subr.mxu0 0.0
      %315 = vmatpush1.msra.mxu0 0.0
      %316 = vmatprep.subr.mxu0 0.0
      %317 = vmatpush1.msra.mxu0 0.0
      %318 = vmatprep.subr.mxu0 0.0
      %319 = vmatpush1.msra.mxu0 0.0
      %320 = vmatprep.subr.mxu0 0.0
      %321 = vmatpush1.msra.mxu0 0.0
      %322 = vmatprep.subr.mxu0 0.0
      %323 = vmatpush1.msra.mxu0 0.0
      %324 = vmatprep.subr.mxu0 0.0
      %325 = vmatpush1.msra.mxu0 0.0
      %326 = vmatprep.subr.mxu0 0.0
      %327 = vmatpush1.msra.mxu0 0.0
      %328 = vmatprep.subr.mxu0 0.0
      %329 = vmatpush1.msra.mxu0 0.0
      %330 = vmatprep.subr.mxu0 0.0
      %331 = vmatpush1.msra.mxu0 0.0
      %332 = vmatprep.subr.mxu0 0.0
      %333 = vmatpush1.msra.mxu0 %v289
      %334 = vmatprep.subr.mxu0 0.0
      %335 = vmatpush1.msra.mxu0 %v288
      %336 = vmatprep.subr.mxu0 0.0
      %337 = vmatpush1.msra.mxu0 %v287
      %338 = vmatprep.subr.mxu0 0.0
      %339 = vmatpush1.msra.mxu0 %v286
      %340 = vmatprep.subr.mxu0 0.0
      %341 = vmatpush2.msra.mxu0 0.0
      %342 = vmatprep.subr.mxu0 0.0
      %343 = vmatpush2.msra.mxu0 0.0
      %344 = vmatprep.subr.mxu0 0.0
      %345 = vmatpush2.msra.mxu0 0.0
      %346 = vmatprep.subr.mxu0 0.0
      %347 = vmatpush2.msra.mxu0 0.0
      %348 = vmatprep.subr.mxu0 0.0
      %349 = vmatpush2.msra.mxu0 0.0
      %350 = vmatprep.subr.mxu0 0.0
      %351 = vmatpush2.msra.mxu0 0.0
      %352 = vmatprep.subr.mxu0 0.0
      %353 = vmatpush2.msra.mxu0 0.0
      %354 = vmatprep.subr.mxu0 0.0
      %355 = vmatpush2.msra.mxu0 0.0
      %356 = vmatprep.subr.mxu0 0.0
      %357 = vmatpush2.msra.mxu0 0.0
      %358 = vmatprep.subr.mxu0 0.0
      %359 = vmatpush2.msra.mxu0 0.0
      %360 = vmatprep.subr.mxu0 0.0
      %361 = vmatpush2.msra.mxu0 0.0
      %362 = vmatprep.subr.mxu0 0.0
      %363 = vmatpush2.msra.mxu0 0.0
      %364 = vmatprep.subr.mxu0 0.0
      %365 = vmatpush2.msra.mxu0 0.0
      %366 = vmatprep.subr.mxu0 0.0
      %367 = vmatpush2.msra.mxu0 0.0
      %368 = vmatprep.subr.mxu0 0.0
      %369 = vmatpush2.msra.mxu0 0.0
      %370 = vmatprep.subr.mxu0 0.0
      %371 = vmatpush2.msra.mxu0 0.0
      %372 = vmatprep.mubr.f32.mxu0 0.0
      %373 = vmatmul.mubr.f32.gmra.mxu0 %v297
      %v374 = vpop.f32.mrf.mxu0
      %v375 = vadd.f32 %v294, %v374
      %v376 = vpop.f32.mrf.mxu0
      %377 = vmatprep.mubr.f32.mxu0 0.0
      %378 = vmatmul.mubr.f32.gmra.mxu0 %v300
      %v379 = vpop.f32.mrf.mxu0
      %v380 = vadd.f32 %v294, %v379
      %v381 = vpop.f32.mrf.mxu0
      %382 = vmatprep.mubr.f32.mxu0 0.0
      %383 = vmatmul.mubr.f32.gmra.mxu0 %v303
      %v384 = vpop.f32.mrf.mxu0
      %v385 = vadd.f32 %v294, %v384
      %v386 = vpop.f32.mrf.mxu0
      %387 = vmatprep.mubr.f32.mxu0 0.0
      %388 = vmatmul.mubr.f32.gmra.mxu0 %v306
      %v389 = vpop.f32.mrf.mxu0
      %v390 = vadd.f32 %v294, %v389
      %v391 = vpop.f32.mrf.mxu0
      %392 = vdwg.mxu0
      %v393 = vld [vmem:[%s2 + $0x1] sm:$0x1]
      %v394 = vld [vmem:[%s2 + $0x2] sm:$0x1]
      %v395 = vld [vmem:[%s2 + $0x3] sm:$0x1]
      %v396 = vmul.f32 %v375, %v375
      %v397 = vmul.f32 %v380, %v380
      %v398 = vmul.f32 %v385, %v385
      %v399 = vmul.f32 %v390, %v390
      %v400 = vlaneseq
      %v401 = vshrl.u32 %v400, 7
      %v402 = vsub.s32 0, %v401
      %v403 = vrot.slane %v393, %v402
      %v404 = vmul.f32 %v403, %v396
      %v405 = vmul.f32 %v403, %v397
      %v406 = vmul.f32 %v403, %v398
      %v407 = vmul.f32 %v403, %v399
      %v408 = vlaneseq
      %v409 = vshrl.u32 %v408, 7
      %v410 = vsub.s32 0, %v409
      %v411 = vrot.slane %v394, %v410
      %v412 = vmul.f32 %v411, %v375
      %v413 = vmul.f32 %v411, %v380
      %v414 = vmul.f32 %v411, %v385
      %v415 = vmul.f32 %v411, %v390
      %v416 = vadd.f32 %v404, %v412
      %v417 = vadd.f32 %v405, %v413
      %v418 = vadd.f32 %v406, %v414
      %v419 = vadd.f32 %v407, %v415
      %v420 = vlaneseq
      %v421 = vshrl.u32 %v420, 7
      %v422 = vsub.s32 0, %v421
      %v423 = vrot.slane %v395, %v422
      %v424 = vadd.f32 %v416, %v423
      %v425 = vadd.f32 %v417, %v423
      %v426 = vadd.f32 %v418, %v423
      %v427 = vadd.f32 %v419, %v423
      %v428 = vld [vmem:[%s3] sm:$0xff]
      %v429 = vld [vmem:[%s3 + $0x8] sm:$0xff]
      %v430 = vld [vmem:[%s3 + $0x10] sm:$0xff]
      %v431 = vld [vmem:[%s3 + $0x18] sm:$0xff]
      %v432 = vld [vmem:[%s3 + $0x20] sm:$0xff]
      %v433 = vld [vmem:[%s3 + $0x28] sm:$0xff]
      %v434 = vld [vmem:[%s3 + $0x30] sm:$0xff]
      %v435 = vld [vmem:[%s3 + $0x38] sm:$0xff]
      %v436 = vld [vmem:[%s4] sm:$0x1]
      %v437 = vlaneseq
      %v438 = vshrl.u32 %v437, 7
      %v439 = vsub.s32 0, %v438
      %v440 = vrot.slane %v436, %v439
      %vm441 = vcmask 523264
      %v443 = vsel %vm441, %v424, 0
      %v446 = vsel %vm441, %v425, 0
      %v449 = vsel %vm441, %v426, 0
      %v452 = vsel %vm441, %v427, 0
      %454 = vmatprep.subr.mxu0 0.0
      %455 = vmatpush1.msra.mxu0 0.0
      %456 = vmatprep.subr.mxu0 0.0
      %457 = vmatpush1.msra.mxu0 0.0
      %458 = vmatprep.subr.mxu0 0.0
      %459 = vmatpush1.msra.mxu0 0.0
      %460 = vmatprep.subr.mxu0 0.0
      %461 = vmatpush1.msra.mxu0 0.0
      %462 = vmatprep.subr.mxu0 0.0
      %463 = vmatpush1.msra.mxu0 0.0
      %464 = vmatprep.subr.mxu0 0.0
      %465 = vmatpush1.msra.mxu0 0.0
      %466 = vmatprep.subr.mxu0 0.0
      %467 = vmatpush1.msra.mxu0 0.0
      %468 = vmatprep.subr.mxu0 0.0
      %469 = vmatpush1.msra.mxu0 0.0
      %470 = vmatprep.subr.mxu0 0.0
      %471 = vmatpush1.msra.mxu0 %v435
      %472 = vmatprep.subr.mxu0 0.0
      %473 = vmatpush1.msra.mxu0 %v434
      %474 = vmatprep.subr.mxu0 0.0
      %475 = vmatpush1.msra.mxu0 %v433
      %476 = vmatprep.subr.mxu0 0.0
      %477 = vmatpush1.msra.mxu0 %v432
      %478 = vmatprep.subr.mxu0 0.0
      %479 = vmatpush1.msra.mxu0 %v431
      %480 = vmatprep.subr.mxu0 0.0
      %481 = vmatpush1.msra.mxu0 %v430
      %482 = vmatprep.subr.mxu0 0.0
      %483 = vmatpush1.msra.mxu0 %v429
      %484 = vmatprep.subr.mxu0 0.0
      %485 = vmatpush1.msra.mxu0 %v428
      %486 = vmatprep.subr.mxu0 0.0
      %487 = vmatpush2.msra.mxu0 0.0
      %488 = vmatprep.subr.mxu0 0.0
      %489 = vmatpush2.msra.mxu0 0.0
      %490 = vmatprep.subr.mxu0 0.0
      %491 = vmatpush2.msra.mxu0 0.0
      %492 = vmatprep.subr.mxu0 0.0
      %493 = vmatpush2.msra.mxu0 0.0
      %494 = vmatprep.subr.mxu0 0.0
      %495 = vmatpush2.msra.mxu0 0.0
      %496 = vmatprep.subr.mxu0 0.0
      %497 = vmatpush2.msra.mxu0 0.0
      %498 = vmatprep.subr.mxu0 0.0
      %499 = vmatpush2.msra.mxu0 0.0
      %500 = vmatprep.subr.mxu0 0.0
      %501 = vmatpush2.msra.mxu0 0.0
      %502 = vmatprep.subr.mxu0 0.0
      %503 = vmatpush2.msra.mxu0 0.0
      %504 = vmatprep.subr.mxu0 0.0
      %505 = vmatpush2.msra.mxu0 0.0
      %506 = vmatprep.subr.mxu0 0.0
      %507 = vmatpush2.msra.mxu0 0.0
      %508 = vmatprep.subr.mxu0 0.0
      %509 = vmatpush2.msra.mxu0 0.0
      %510 = vmatprep.subr.mxu0 0.0
      %511 = vmatpush2.msra.mxu0 0.0
      %512 = vmatprep.subr.mxu0 0.0
      %513 = vmatpush2.msra.mxu0 0.0
      %514 = vmatprep.subr.mxu0 0.0
      %515 = vmatpush2.msra.mxu0 0.0
      %516 = vmatprep.subr.mxu0 0.0
      %517 = vmatpush2.msra.mxu0 0.0
      %518 = vmatprep.mubr.f32.mxu0 0.0
      %519 = vmatmul.mubr.f32.gmra.mxu0 %v443
      %v520 = vpop.f32.mrf.mxu0
      %v521 = vadd.f32 %v440, %v520
      %v522 = vpop.f32.mrf.mxu0
      %523 = vmatprep.mubr.f32.mxu0 0.0
      %524 = vmatmul.mubr.f32.gmra.mxu0 %v446
      %v525 = vpop.f32.mrf.mxu0
      %v526 = vadd.f32 %v440, %v525
      %v527 = vpop.f32.mrf.mxu0
      %528 = vmatprep.mubr.f32.mxu0 0.0
      %529 = vmatmul.mubr.f32.gmra.mxu0 %v449
      %v530 = vpop.f32.mrf.mxu0
      %v531 = vadd.f32 %v440, %v530
      %v532 = vpop.f32.mrf.mxu0
      %533 = vmatprep.mubr.f32.mxu0 0.0
      %534 = vmatmul.mubr.f32.gmra.mxu0 %v452
      %v535 = vpop.f32.mrf.mxu0
      %v536 = vadd.f32 %v440, %v535
      %v537 = vpop.f32.mrf.mxu0
      %538 = vdwg.mxu0
      %v539 = vld [vmem:[%s4 + $0x1] sm:$0x1]
      %v540 = vld [vmem:[%s4 + $0x2] sm:$0x1]
      %v541 = vld [vmem:[%s4 + $0x3] sm:$0x1]
      %v542 = vmul.f32 %v521, %v521
      %v543 = vmul.f32 %v526, %v526
      %v544 = vmul.f32 %v531, %v531
      %v545 = vmul.f32 %v536, %v536
      %v546 = vlaneseq
      %v547 = vshrl.u32 %v546, 7
      %v548 = vsub.s32 0, %v547
      %v549 = vrot.slane %v539, %v548
      %v550 = vmul.f32 %v549, %v542
      %v551 = vmul.f32 %v549, %v543
      %v552 = vmul.f32 %v549, %v544
      %v553 = vmul.f32 %v549, %v545
      %v554 = vlaneseq
      %v555 = vshrl.u32 %v554, 7
      %v556 = vsub.s32 0, %v555
      %v557 = vrot.slane %v540, %v556
      %v558 = vmul.f32 %v557, %v521
      %v559 = vmul.f32 %v557, %v526
      %v560 = vmul.f32 %v557, %v531
      %v561 = vmul.f32 %v557, %v536
      %v562 = vadd.f32 %v550, %v558
      %v563 = vadd.f32 %v551, %v559
      %v564 = vadd.f32 %v552, %v560
      %v565 = vadd.f32 %v553, %v561
      %v566 = vlaneseq
      %v567 = vshrl.u32 %v566, 7
      %v568 = vsub.s32 0, %v567
      %v569 = vrot.slane %v541, %v568
      %v570 = vadd.f32 %v562, %v569
      %v571 = vadd.f32 %v563, %v569
      %v572 = vadd.f32 %v564, %v569
      %v573 = vadd.f32 %v565, %v569
      %v574 = vld [vmem:[%s5] sm:$0xff]
      %v575 = vld [vmem:[%s5 + $0x8] sm:$0xff]
      %v576 = vld [vmem:[%s5 + $0x10] sm:$0xff]
      %v577 = vld [vmem:[%s5 + $0x18] sm:$0xff]
      %v578 = vld [vmem:[%s6] sm:$0x1]
      %v580 = vlaneseq
      %v581 = vshrl.u32 %v580, 7
      %v582 = vsub.s32 0, %v581
      %v583 = vrot.slane %v578, %v582
      %v586 = vsel %vm295, %v570, 0
      %v589 = vsel %vm295, %v571, 0
      %v592 = vsel %vm295, %v572, 0
      %v595 = vsel %vm295, %v573, 0
      %597 = vmatprep.subr.mxu0 0.0
      %598 = vmatpush1.msra.mxu0 0.0
      %599 = vmatprep.subr.mxu0 0.0
      %600 = vmatpush1.msra.mxu0 0.0
      %601 = vmatprep.subr.mxu0 0.0
      %602 = vmatpush1.msra.mxu0 0.0
      %603 = vmatprep.subr.mxu0 0.0
      %604 = vmatpush1.msra.mxu0 0.0
      %605 = vmatprep.subr.mxu0 0.0
      %606 = vmatpush1.msra.mxu0 0.0
      %607 = vmatprep.subr.mxu0 0.0
      %608 = vmatpush1.msra.mxu0 0.0
      %609 = vmatprep.subr.mxu0 0.0
      %610 = vmatpush1.msra.mxu0 0.0
      %611 = vmatprep.subr.mxu0 0.0
      %612 = vmatpush1.msra.mxu0 0.0
      %613 = vmatprep.subr.mxu0 0.0
      %614 = vmatpush1.msra.mxu0 0.0
      %615 = vmatprep.subr.mxu0 0.0
      %616 = vmatpush1.msra.mxu0 0.0
      %617 = vmatprep.subr.mxu0 0.0
      %618 = vmatpush1.msra.mxu0 0.0
      %619 = vmatprep.subr.mxu0 0.0
      %620 = vmatpush1.msra.mxu0 0.0
      %621 = vmatprep.subr.mxu0 0.0
      %622 = vmatpush1.msra.mxu0 %v577
      %623 = vmatprep.subr.mxu0 0.0
      %624 = vmatpush1.msra.mxu0 %v576
      %625 = vmatprep.subr.mxu0 0.0
      %626 = vmatpush1.msra.mxu0 %v575
      %627 = vmatprep.subr.mxu0 0.0
      %628 = vmatpush1.msra.mxu0 %v574
      %629 = vmatprep.subr.mxu0 0.0
      %630 = vmatpush2.msra.mxu0 0.0
      %631 = vmatprep.subr.mxu0 0.0
      %632 = vmatpush2.msra.mxu0 0.0
      %633 = vmatprep.subr.mxu0 0.0
      %634 = vmatpush2.msra.mxu0 0.0
      %635 = vmatprep.subr.mxu0 0.0
      %636 = vmatpush2.msra.mxu0 0.0
      %637 = vmatprep.subr.mxu0 0.0
      %638 = vmatpush2.msra.mxu0 0.0
      %639 = vmatprep.subr.mxu0 0.0
      %640 = vmatpush2.msra.mxu0 0.0
      %641 = vmatprep.subr.mxu0 0.0
      %642 = vmatpush2.msra.mxu0 0.0
      %643 = vmatprep.subr.mxu0 0.0
      %644 = vmatpush2.msra.mxu0 0.0
      %645 = vmatprep.subr.mxu0 0.0
      %646 = vmatpush2.msra.mxu0 0.0
      %647 = vmatprep.subr.mxu0 0.0
      %648 = vmatpush2.msra.mxu0 0.0
      %649 = vmatprep.subr.mxu0 0.0
      %650 = vmatpush2.msra.mxu0 0.0
      %651 = vmatprep.subr.mxu0 0.0
      %652 = vmatpush2.msra.mxu0 0.0
      %653 = vmatprep.subr.mxu0 0.0
      %654 = vmatpush2.msra.mxu0 0.0
      %655 = vmatprep.subr.mxu0 0.0
      %656 = vmatpush2.msra.mxu0 0.0
      %657 = vmatprep.subr.mxu0 0.0
      %658 = vmatpush2.msra.mxu0 0.0
      %659 = vmatprep.subr.mxu0 0.0
      %660 = vmatpush2.msra.mxu0 0.0
      %661 = vmatprep.mubr.f32.mxu0 0.0
      %662 = vmatmul.mubr.f32.gmra.mxu0 %v586
      %v663 = vpop.f32.mrf.mxu0
      %v664 = vadd.f32 %v583, %v663
      %v665 = vpop.f32.mrf.mxu0
      %666 = vmatprep.mubr.f32.mxu0 0.0
      %667 = vmatmul.mubr.f32.gmra.mxu0 %v589
      %v668 = vpop.f32.mrf.mxu0
      %v669 = vadd.f32 %v583, %v668
      %v670 = vpop.f32.mrf.mxu0
      %671 = vmatprep.mubr.f32.mxu0 0.0
      %672 = vmatmul.mubr.f32.gmra.mxu0 %v592
      %v673 = vpop.f32.mrf.mxu0
      %v674 = vadd.f32 %v583, %v673
      %v675 = vpop.f32.mrf.mxu0
      %676 = vmatprep.mubr.f32.mxu0 0.0
      %677 = vmatmul.mubr.f32.gmra.mxu0 %v595
      %v678 = vpop.f32.mrf.mxu0
      %v679 = vadd.f32 %v583, %v678
      %v680 = vpop.f32.mrf.mxu0
      %681 = vdwg.mxu0
      %v682 = vxor.u32 %v664, 2147483648
      %v683 = vxor.u32 %v669, 2147483648
      %v684 = vxor.u32 %v674, 2147483648
      %v685 = vxor.u32 %v679, 2147483648
      %v686 = vmul.f32 %v682, 1.442695
      %v687 = vpow.pop %v686
      %v688 = vmul.f32 %v683, 1.442695
      %v689 = vpow.pop %v688
      %v690 = vmul.f32 %v684, 1.442695
      %v691 = vpow.pop %v690
      %v692 = vmul.f32 %v685, 1.442695
      %v693 = vpow.pop %v692
      %v694 = vadd.f32 %v687, 1.0
      %v695 = vadd.f32 %v689, 1.0
      %v696 = vadd.f32 %v691, 1.0
      %v697 = vadd.f32 %v693, 1.0
      %v698 = vrcp.pop %v694
      %v699 = vmul.f32 1.0, %v698
      %v700 = vrcp.pop %v695
      %v701 = vmul.f32 1.0, %v700
      %v702 = vrcp.pop %v696
      %v703 = vmul.f32 1.0, %v702
      %v704 = vrcp.pop %v697
      %v705 = vmul.f32 1.0, %v704
      %vm706 = vcmask 64512
      %707 = vst.msk [vmem:[%s280] sm:$0xff] %vm706, %v699
      %708 = vst.msk [vmem:[%s280 + $0x8] sm:$0xff] %vm706, %v701
      %709 = vst.msk [vmem:[%s280 + $0x10] sm:$0xff] %vm706, %v703
      %710 = vst.msk [vmem:[%s280 + $0x18] sm:$0xff] %vm706, %v705
      %s711 = smul.u32 4, %s18
      %p712 = scmp.lt.s32.totalorder %s711, 7
      %s713 = scalar_select %p712, %s711, 7
      %s714 = smul.addr %s713, 8
      %s715 = scalar_lea.vmem %s7, %s714
      // Predicated region
      $region49: #{tpu_custom_call.1} parent=47 // pred_check
        %p716 = pneg %p188
      $region50: #{tpu_custom_call.1} parent=47 // pred_check_branch
        %718 = sbr.rel (%p716) target = $region52
      $region51: #{tpu_custom_call.1} parent=47 // pred_region
        %s719 = smul.u32 4, %s18
      $region52: #{tpu_custom_call.1} parent=47 // pred_fallthru
        _
    $region48: #{tpu_custom_call.1} parent=5 // pred_fallthru
      _
    %p720 = scmp.le.s32.totalorder 2, %s13
    // Predicated region
    $region53: #{tpu_custom_call.1} parent=5 // pred_check
      %p721 = pneg %p720
    $region54: #{tpu_custom_call.1} parent=5 // pred_check_branch
      %723 = sbr.rel (%p721) target = $region56
    $region55: #{tpu_custom_call.1} parent=5 // pred_region
      %s724 = ssub.s32 %s13, 2
      // Predicated region
      $region57: #{tpu_custom_call.1} parent=55 // pred_check
        %p725 = pneg %p194
      $region58: #{tpu_custom_call.1} parent=55 // pred_check_branch
        %727 = sbr.rel (%p725) target = $region60
      $region59: #{tpu_custom_call.1} parent=55 // pred_region
        %s728 = smul.u32 4, %s19
        %p729 = scmp.lt.s32.totalorder %s728, 7
        %s730 = scalar_select %p729, %s728, 7
        %s731 = smul.addr %s730, 8
        %s732 = scalar_lea.vmem %s7, %s731
      $region60: #{tpu_custom_call.1} parent=55 // pred_fallthru
        _
    $region56: #{tpu_custom_call.1} parent=5 // pred_fallthru
      _
  $region6: #{tpu_custom_call.1} parent=0 // loop_footer
    %s17 = sadd.s32 1, %s13
  $region7: #{tpu_custom_call.1} parent=0 // loop_footer_branch
    %12 = sbr.rel target = $region3
  $region8: #{tpu_custom_call.1} parent=0 // loop_exit
    _

</llo_original>
